<compile_context>
chip_gen: v7x
topology: tpu7x:2x2x1
jax: 0.10.0
libtpu: 0.0.40
codegen_flags: <defaults>
</compile_context>

<pallas_src>
import functools

import jax
import jax.numpy as jnp
import numpy as np
from jax import lax
from jax.experimental import pallas as pl
from jax.experimental.pallas import tpu as pltpu


def _cdae_kernel(x_ref, noise_ref, mw_ref, bj_ref, o_ref, *,
                 stride, k_h, cout, ho, wo, compute_dtype):
    """One grid step = one batch element.

    x_ref, noise_ref : (1, Cin, H, W)          input / noise block
    mw_ref           : (Kh, Cin, W, Cout*Wo)   weights with kw-selection folded in
    bj_ref           : (1, Cout*Wo)            bias broadcast over wo
    o_ref            : (1, Cout, Ho, Wo)       output block (final NCHW layout)
    """
    h = x_ref.shape[2]
    j = cout * wo

    # Denoising mask applied on the fly (single HBM read of x and noise).
    xm = jnp.where(noise_ref[0] > -0.1, x_ref[0], 0.0).astype(compute_dtype)  # (Cin,H,W)

    # Row-selection iotas for the kh (height) taps.
    tt = lax.broadcasted_iota(jnp.int32, (ho, h), 0)     # output row index
    hh = lax.broadcasted_iota(jnp.int32, (ho, h), 1)     # input  row index

    acc = jnp.zeros((ho, j), jnp.float32)
    for kh in range(k_h):
        # q[ci, h, co*Wo+v] = sum_w xm[ci,h,w] * mw[kh,ci,w,co*Wo+v]
        # (batched over ci, runs on the MXU; mw already contains the kw taps).
        q = jnp.einsum('chw,cwj->chj', xm, mw_ref[kh],
                       preferred_element_type=jnp.float32)              # (Cin, H, J)
        q = jnp.sum(q, axis=0)                                          # (H, J)
        # Select rows h == stride*t + kh with an exact 0/1 matrix (MXU).
        r = (hh == stride * tt + kh).astype(jnp.float32)                # (Ho, H)
        acc = acc + jnp.dot(r, q, preferred_element_type=jnp.float32)   # (Ho, J)

    y = jnp.maximum(acc + bj_ref[...], 0.0).astype(o_ref.dtype)         # (Ho, J)

    # Scatter the J = (co, wo) lane axis into the NCHW output block.
    for co in range(cout):
        o_ref[0, co, :, :] = y[:, co * wo:(co + 1) * wo]


def cdae_forward(x, noise, weight, bias, stride, *, compute_dtype=None):
    """x, noise: (N, Cin, H, W); weight: (Cout, Cin, Kh, Kw); bias: (Cout,).

    Returns ReLU(conv2d(x * (noise > -0.1), weight, stride, padding=0) + bias)
    with shape (N, Cout, Ho, Wo)."""
    n, cin, h, w = x.shape
    cout, _, k_h, k_w = weight.shape
    ho = (h - k_h) // stride + 1
    wo = (w - k_w) // stride + 1
    j = cout * wo
    dt = jnp.dtype(compute_dtype) if compute_dtype is not None else x.dtype

    # Fold the width-tap (kw) selection of the im2col into the weights:
    #   mw[kh, ci, w_, co*Wo + v] = sum_kw [w_ == stride*v + kw] * weight[co, ci, kh, kw]
    w_idx = jnp.arange(w)[:, None]
    v_idx = jnp.arange(wo)[None, :]
    mw_parts = []
    for kh in range(k_h):
        part = jnp.zeros((cin, w, cout, wo), jnp.float32)
        for kw in range(k_w):
            sel = (w_idx == stride * v_idx + kw).astype(jnp.float32)         # (W, Wo)
            part = part + jnp.einsum('oc,wv->cwov',
                                     weight[:, :, kh, kw].astype(jnp.float32), sel)
        mw_parts.append(part)
    mw = jnp.stack(mw_parts, 0).reshape(k_h, cin, w, j).astype(dt)           # (Kh,Cin,W,J)
    bj = jnp.repeat(bias.astype(jnp.float32), wo).reshape(1, j)              # (1, J)

    kernel = functools.partial(
        _cdae_kernel, stride=stride, k_h=k_h, cout=cout, ho=ho, wo=wo,
        compute_dtype=dt)

    # VMEM budget: double-buffered x/noise/out blocks + resident weights + live
    # intermediates, clamped to <= 48 MiB so it also fits v7x's 64 MiB VMEM.
    elem = x.dtype.itemsize
    est = (2 * 2 * cin * h * w * elem            # x + noise blocks, double buffered
           + 2 * cout * ho * wo * elem           # out block, double buffered
           + mw.size * mw.dtype.itemsize + bj.size * 4
           + cin * h * j * 4 + 4 * ho * j * 4)   # q / acc / y intermediates
    vmem_limit = int(min(48 << 20, max(16 << 20, 2 * est)))

    return pl.pallas_call(
        kernel,
        out_shape=jax.ShapeDtypeStruct((n, cout, ho, wo), x.dtype),
        grid=(n,),
        in_specs=[
            pl.BlockSpec((1, cin, h, w), lambda b: (b, 0, 0, 0)),        # x
            pl.BlockSpec((1, cin, h, w), lambda b: (b, 0, 0, 0)),        # noise
            pl.BlockSpec((k_h, cin, w, j), lambda b: (0, 0, 0, 0)),      # mw (resident)
            pl.BlockSpec((1, j), lambda b: (0, 0)),                      # bias (resident)
        ],
        out_specs=pl.BlockSpec((1, cout, ho, wo), lambda b: (b, 0, 0, 0)),
        compiler_params=pltpu.CompilerParams(
            dimension_semantics=("parallel",),       # batch steps -> both TCs on v7x
            vmem_limit_bytes=vmem_limit),
    )(x, noise, mw, bj)


def cdae_reference(x, noise, weight, bias, stride):
    """Pure-JAX reference (XLA conv) for validation."""
    mask = (noise > -0.1).astype(x.dtype)
    y = lax.conv_general_dilated(
        x * mask, weight, window_strides=(stride, stride), padding="VALID",
        dimension_numbers=("NCHW", "OIHW", "NCHW"))
    return jnp.maximum(y + bias.reshape(1, -1, 1, 1), 0.0)


if __name__ == "__main__":
    key = jax.random.PRNGKey(0)
    k_x, k_n, k_w, k_b = jax.random.split(key, 4)

    # Small, CDAE-consistent shapes: input_size=4, output_size=8, stride=2.
    N, Cin, H, W = 2, 4, 16, 16
    Cout, stride = 8, 2

    x = jax.random.normal(k_x, (N, Cin, H, W), dtype=jnp.float32)
    # noise ~ N(0, 0.1): matches x.data.new(x.size()).normal_(0, 0.1)
    noise = 0.1 * jax.random.normal(k_n, (N, Cin, H, W), dtype=jnp.float32)

    # Deterministic parameter init (shapes match nn.Conv2d(Cin, Cout, 2, stride)).
    fan_in = Cin * 2 * 2
    bound = 1.0 / np.sqrt(fan_in)
    weight = jax.random.uniform(k_w, (Cout, Cin, 2, 2), jnp.float32, -bound, bound)
    bias = jax.random.uniform(k_b, (Cout,), jnp.float32, -bound, bound)

    fwd = jax.jit(lambda a, b, c, d: cdae_forward(a, b, c, d, stride))
    y = jax.block_until_ready(fwd(x, noise, weight, bias))

    y_ref = jax.block_until_ready(cdae_reference(x, noise, weight, bias, stride))
    np.testing.assert_allclose(np.asarray(y), np.asarray(y_ref), atol=2e-5, rtol=2e-5)

    print("KERNEL_OK")
</pallas_src>

<mosaic_0001>
module attributes {stable_mosaic.version = 11 : i64} {
  func.func @_cdae_kernel(%arg0: i32, %arg1: memref<1x4x16x16xf32, #tpu.memory_space<vmem>>, %arg2: memref<1x4x16x16xf32, #tpu.memory_space<vmem>>, %arg3: memref<2x4x16x64xf32, #tpu.memory_space<vmem>>, %arg4: memref<1x64xf32, #tpu.memory_space<vmem>>, %arg5: memref<1x8x8x8xf32, #tpu.memory_space<vmem>>) attributes {dimension_semantics = [#tpu.dimension_semantics<parallel>], iteration_bounds = array<i64: 2>, scalar_prefetch = 0 : i64, scratch_operands = 0 : i64, tpu.core_type = #tpu.core_type<tc>, window_params = [{transform_indices = @transform_0, window_bounds = array<i64: 1, 4, 16, 16>}, {transform_indices = @transform_1, window_bounds = array<i64: 1, 4, 16, 16>}, {pipeline_mode = #tpu.pipeline_mode<synchronous>, transform_indices = @transform_2, window_bounds = array<i64: 2, 4, 16, 64>}, {pipeline_mode = #tpu.pipeline_mode<synchronous>, transform_indices = @transform_3, window_bounds = array<i64: 1, 64>}, {transform_indices = @transform_4, window_bounds = array<i64: 1, 8, 8, 8>}]} {
    %c0 = arith.constant 0 : index
    %c0_0 = arith.constant 0 : index
    %c0_1 = arith.constant 0 : index
    %c0_2 = arith.constant 0 : index
    %0 = vector.load %arg2[%c0, %c0_0, %c0_1, %c0_2] : memref<1x4x16x16xf32, #tpu.memory_space<vmem>>, vector<1x4x16x16xf32>
    %1 = vector.shape_cast %0 : vector<1x4x16x16xf32> to vector<4x16x16xf32>
    %cst = arith.constant -1.000000e-01 : f32
    %2 = vector.broadcast %cst : f32 to vector<4x16x16xf32>
    %3 = arith.cmpf ogt, %1, %2 : vector<4x16x16xf32>
    %c0_3 = arith.constant 0 : index
    %c0_4 = arith.constant 0 : index
    %c0_5 = arith.constant 0 : index
    %c0_6 = arith.constant 0 : index
    %4 = vector.load %arg1[%c0_3, %c0_4, %c0_5, %c0_6] : memref<1x4x16x16xf32, #tpu.memory_space<vmem>>, vector<1x4x16x16xf32>
    %5 = vector.shape_cast %4 : vector<1x4x16x16xf32> to vector<4x16x16xf32>
    %cst_7 = arith.constant 0.000000e+00 : f32
    %6 = vector.broadcast %cst_7 : f32 to vector<4x16x16xf32>
    %7 = arith.select %3, %5, %6 : vector<4x16x16xi1>, vector<4x16x16xf32>
    %8 = tpu.iota {dimensions = array<i32: 0>} : vector<8x16xi32>
    %9 = tpu.iota {dimensions = array<i32: 1>} : vector<8x16xi32>
    %cst_8 = arith.constant 0.000000e+00 : f32
    %10 = vector.broadcast %cst_8 : f32 to vector<8x64xf32>
    %c0_9 = arith.constant 0 : index
    %c0_10 = arith.constant 0 : index
    %c0_11 = arith.constant 0 : index
    %c0_12 = arith.constant 0 : index
    %11 = vector.load %arg3[%c0_9, %c0_10, %c0_11, %c0_12] : memref<2x4x16x64xf32, #tpu.memory_space<vmem>>, vector<1x4x16x64xf32>
    %12 = vector.shape_cast %11 : vector<1x4x16x64xf32> to vector<4x16x64xf32>
    "tpu.trace_start"() <{level = 10 : i32, message = "chw,cwj->chj"}> : () -> ()
    %cst_13 = arith.constant dense<0.000000e+00> : vector<4x16x64xf32>
    %13 = tpu.matmul %7, %12, %cst_13 {dimension_numbers = #tpu.dot_dimension_numbers<[2], [1], [1], [2], [0, 0, 0, 1, 1, 2], [0], [0]>} : vector<4x16x16xf32>, vector<4x16x64xf32>, vector<4x16x64xf32> -> vector<4x16x64xf32>
    "tpu.trace_stop"() : () -> ()
    %cst_14 = arith.constant dense<0.000000e+00> : vector<16x64xf32>
    %14 = vector.multi_reduction <add>, %13, %cst_14 [0] : vector<4x16x64xf32> to vector<16x64xf32>
    %c2_i32 = arith.constant 2 : i32
    %15 = vector.broadcast %c2_i32 : i32 to vector<8x16xi32>
    %16 = arith.muli %15, %8 : vector<8x16xi32>
    %c0_i32 = arith.constant 0 : i32
    %17 = vector.broadcast %c0_i32 : i32 to vector<8x16xi32>
    %18 = arith.addi %16, %17 : vector<8x16xi32>
    %19 = arith.cmpi eq, %9, %18 : vector<8x16xi32>
    %20 = arith.extui %19 : vector<8x16xi1> to vector<8x16xi32>
    %21 = arith.sitofp %20 : vector<8x16xi32> to vector<8x16xf32>
    %cst_15 = arith.constant dense<0.000000e+00> : vector<8x64xf32>
    %22 = tpu.matmul %21, %14, %cst_15 {dimension_numbers = #tpu.dot_dimension_numbers<[1], [0], [0], [1], [0, 0, 1, 1], [], []>} : vector<8x16xf32>, vector<16x64xf32>, vector<8x64xf32> -> vector<8x64xf32>
    %23 = arith.addf %10, %22 : vector<8x64xf32>
    %c1 = arith.constant 1 : index
    %c0_16 = arith.constant 0 : index
    %c0_17 = arith.constant 0 : index
    %c0_18 = arith.constant 0 : index
    %24 = vector.load %arg3[%c1, %c0_16, %c0_17, %c0_18] : memref<2x4x16x64xf32, #tpu.memory_space<vmem>>, vector<1x4x16x64xf32>
    %25 = vector.shape_cast %24 : vector<1x4x16x64xf32> to vector<4x16x64xf32>
    "tpu.trace_start"() <{level = 10 : i32, message = "chw,cwj->chj"}> : () -> ()
    %cst_19 = arith.constant dense<0.000000e+00> : vector<4x16x64xf32>
    %26 = tpu.matmul %7, %25, %cst_19 {dimension_numbers = #tpu.dot_dimension_numbers<[2], [1], [1], [2], [0, 0, 0, 1, 1, 2], [0], [0]>} : vector<4x16x16xf32>, vector<4x16x64xf32>, vector<4x16x64xf32> -> vector<4x16x64xf32>
    "tpu.trace_stop"() : () -> ()
    %cst_20 = arith.constant dense<0.000000e+00> : vector<16x64xf32>
    %27 = vector.multi_reduction <add>, %26, %cst_20 [0] : vector<4x16x64xf32> to vector<16x64xf32>
    %c2_i32_21 = arith.constant 2 : i32
    %28 = vector.broadcast %c2_i32_21 : i32 to vector<8x16xi32>
    %29 = arith.muli %28, %8 : vector<8x16xi32>
    %c1_i32 = arith.constant 1 : i32
    %30 = vector.broadcast %c1_i32 : i32 to vector<8x16xi32>
    %31 = arith.addi %29, %30 : vector<8x16xi32>
    %32 = arith.cmpi eq, %9, %31 : vector<8x16xi32>
    %33 = arith.extui %32 : vector<8x16xi1> to vector<8x16xi32>
    %34 = arith.sitofp %33 : vector<8x16xi32> to vector<8x16xf32>
    %cst_22 = arith.constant dense<0.000000e+00> : vector<8x64xf32>
    %35 = tpu.matmul %34, %27, %cst_22 {dimension_numbers = #tpu.dot_dimension_numbers<[1], [0], [0], [1], [0, 0, 1, 1], [], []>} : vector<8x16xf32>, vector<16x64xf32>, vector<8x64xf32> -> vector<8x64xf32>
    %36 = arith.addf %23, %35 : vector<8x64xf32>
    %c0_23 = arith.constant 0 : index
    %c0_24 = arith.constant 0 : index
    %37 = vector.load %arg4[%c0_23, %c0_24] : memref<1x64xf32, #tpu.memory_space<vmem>>, vector<1x64xf32>
    %38 = vector.broadcast %37 : vector<1x64xf32> to vector<8x64xf32>
    %39 = arith.addf %36, %38 : vector<8x64xf32>
    %cst_25 = arith.constant 0.000000e+00 : f32
    %40 = vector.broadcast %cst_25 : f32 to vector<8x64xf32>
    %41 = arith.maximumf %39, %40 : vector<8x64xf32>
    %42 = vector.extract_strided_slice %41 {offsets = [0, 0], sizes = [8, 8], strides = [1, 1]} : vector<8x64xf32> to vector<8x8xf32>
    %c0_26 = arith.constant 0 : index
    %c0_27 = arith.constant 0 : index
    %c0_28 = arith.constant 0 : index
    %c0_29 = arith.constant 0 : index
    %43 = vector.load %arg5[%c0_26, %c0_27, %c0_28, %c0_29] : memref<1x8x8x8xf32, #tpu.memory_space<vmem>>, vector<1x1x8x8xf32>
    %44 = vector.shape_cast %43 : vector<1x1x8x8xf32> to vector<8x8xf32>
    %45 = vector.shape_cast %42 : vector<8x8xf32> to vector<1x1x8x8xf32>
    tpu.vector_store %arg5[%c0_26, %c0_27, %c0_28, %c0_29], %45 {strides = array<i32>} : memref<1x8x8x8xf32, #tpu.memory_space<vmem>>, vector<1x1x8x8xf32>,
    %46 = vector.extract_strided_slice %41 {offsets = [0, 8], sizes = [8, 8], strides = [1, 1]} : vector<8x64xf32> to vector<8x8xf32>
    %c0_30 = arith.constant 0 : index
    %c1_31 = arith.constant 1 : index
    %c0_32 = arith.constant 0 : index
    %c0_33 = arith.constant 0 : index
    %47 = vector.load %arg5[%c0_30, %c1_31, %c0_32, %c0_33] : memref<1x8x8x8xf32, #tpu.memory_space<vmem>>, vector<1x1x8x8xf32>
    %48 = vector.shape_cast %47 : vector<1x1x8x8xf32> to vector<8x8xf32>
    %49 = vector.shape_cast %46 : vector<8x8xf32> to vector<1x1x8x8xf32>
    tpu.vector_store %arg5[%c0_30, %c1_31, %c0_32, %c0_33], %49 {strides = array<i32>} : memref<1x8x8x8xf32, #tpu.memory_space<vmem>>, vector<1x1x8x8xf32>,
    %50 = vector.extract_strided_slice %41 {offsets = [0, 16], sizes = [8, 8], strides = [1, 1]} : vector<8x64xf32> to vector<8x8xf32>
    %c0_34 = arith.constant 0 : index
    %c2 = arith.constant 2 : index
    %c0_35 = arith.constant 0 : index
    %c0_36 = arith.constant 0 : index
    %51 = vector.load %arg5[%c0_34, %c2, %c0_35, %c0_36] : memref<1x8x8x8xf32, #tpu.memory_space<vmem>>, vector<1x1x8x8xf32>
    %52 = vector.shape_cast %51 : vector<1x1x8x8xf32> to vector<8x8xf32>
    %53 = vector.shape_cast %50 : vector<8x8xf32> to vector<1x1x8x8xf32>
    tpu.vector_store %arg5[%c0_34, %c2, %c0_35, %c0_36], %53 {strides = array<i32>} : memref<1x8x8x8xf32, #tpu.memory_space<vmem>>, vector<1x1x8x8xf32>,
    %54 = vector.extract_strided_slice %41 {offsets = [0, 24], sizes = [8, 8], strides = [1, 1]} : vector<8x64xf32> to vector<8x8xf32>
    %c0_37 = arith.constant 0 : index
    %c3 = arith.constant 3 : index
    %c0_38 = arith.constant 0 : index
    %c0_39 = arith.constant 0 : index
    %55 = vector.load %arg5[%c0_37, %c3, %c0_38, %c0_39] : memref<1x8x8x8xf32, #tpu.memory_space<vmem>>, vector<1x1x8x8xf32>
    %56 = vector.shape_cast %55 : vector<1x1x8x8xf32> to vector<8x8xf32>
    %57 = vector.shape_cast %54 : vector<8x8xf32> to vector<1x1x8x8xf32>
    tpu.vector_store %arg5[%c0_37, %c3, %c0_38, %c0_39], %57 {strides = array<i32>} : memref<1x8x8x8xf32, #tpu.memory_space<vmem>>, vector<1x1x8x8xf32>,
    %58 = vector.extract_strided_slice %41 {offsets = [0, 32], sizes = [8, 8], strides = [1, 1]} : vector<8x64xf32> to vector<8x8xf32>
    %c0_40 = arith.constant 0 : index
    %c4 = arith.constant 4 : index
    %c0_41 = arith.constant 0 : index
    %c0_42 = arith.constant 0 : index
    %59 = vector.load %arg5[%c0_40, %c4, %c0_41, %c0_42] : memref<1x8x8x8xf32, #tpu.memory_space<vmem>>, vector<1x1x8x8xf32>
    %60 = vector.shape_cast %59 : vector<1x1x8x8xf32> to vector<8x8xf32>
    %61 = vector.shape_cast %58 : vector<8x8xf32> to vector<1x1x8x8xf32>
    tpu.vector_store %arg5[%c0_40, %c4, %c0_41, %c0_42], %61 {strides = array<i32>} : memref<1x8x8x8xf32, #tpu.memory_space<vmem>>, vector<1x1x8x8xf32>,
    %62 = vector.extract_strided_slice %41 {offsets = [0, 40], sizes = [8, 8], strides = [1, 1]} : vector<8x64xf32> to vector<8x8xf32>
    %c0_43 = arith.constant 0 : index
    %c5 = arith.constant 5 : index
    %c0_44 = arith.constant 0 : index
    %c0_45 = arith.constant 0 : index
    %63 = vector.load %arg5[%c0_43, %c5, %c0_44, %c0_45] : memref<1x8x8x8xf32, #tpu.memory_space<vmem>>, vector<1x1x8x8xf32>
    %64 = vector.shape_cast %63 : vector<1x1x8x8xf32> to vector<8x8xf32>
    %65 = vector.shape_cast %62 : vector<8x8xf32> to vector<1x1x8x8xf32>
    tpu.vector_store %arg5[%c0_43, %c5, %c0_44, %c0_45], %65 {strides = array<i32>} : memref<1x8x8x8xf32, #tpu.memory_space<vmem>>, vector<1x1x8x8xf32>,
    %66 = vector.extract_strided_slice %41 {offsets = [0, 48], sizes = [8, 8], strides = [1, 1]} : vector<8x64xf32> to vector<8x8xf32>
    %c0_46 = arith.constant 0 : index
    %c6 = arith.constant 6 : index
    %c0_47 = arith.constant 0 : index
    %c0_48 = arith.constant 0 : index
    %67 = vector.load %arg5[%c0_46, %c6, %c0_47, %c0_48] : memref<1x8x8x8xf32, #tpu.memory_space<vmem>>, vector<1x1x8x8xf32>
    %68 = vector.shape_cast %67 : vector<1x1x8x8xf32> to vector<8x8xf32>
    %69 = vector.shape_cast %66 : vector<8x8xf32> to vector<1x1x8x8xf32>
    tpu.vector_store %arg5[%c0_46, %c6, %c0_47, %c0_48], %69 {strides = array<i32>} : memref<1x8x8x8xf32, #tpu.memory_space<vmem>>, vector<1x1x8x8xf32>,
    %70 = vector.extract_strided_slice %41 {offsets = [0, 56], sizes = [8, 8], strides = [1, 1]} : vector<8x64xf32> to vector<8x8xf32>
    %c0_49 = arith.constant 0 : index
    %c7 = arith.constant 7 : index
    %c0_50 = arith.constant 0 : index
    %c0_51 = arith.constant 0 : index
    %71 = vector.load %arg5[%c0_49, %c7, %c0_50, %c0_51] : memref<1x8x8x8xf32, #tpu.memory_space<vmem>>, vector<1x1x8x8xf32>
    %72 = vector.shape_cast %71 : vector<1x1x8x8xf32> to vector<8x8xf32>
    %73 = vector.shape_cast %70 : vector<8x8xf32> to vector<1x1x8x8xf32>
    tpu.vector_store %arg5[%c0_49, %c7, %c0_50, %c0_51], %73 {strides = array<i32>} : memref<1x8x8x8xf32, #tpu.memory_space<vmem>>, vector<1x1x8x8xf32>,
    return
  }
  func.func @transform_0(%arg0: i32) -> (i32, i32, i32, i32) {
    %c0_i32 = arith.constant 0 : i32
    %c0_i32_0 = arith.constant 0 : i32
    %c0_i32_1 = arith.constant 0 : i32
    %c0_i32_2 = arith.constant 0 : i32
    return %arg0, %c0_i32, %c0_i32_0, %c0_i32_1 : i32, i32, i32, i32
  }
  func.func @transform_1(%arg0: i32) -> (i32, i32, i32, i32) {
    %c0_i32 = arith.constant 0 : i32
    %c0_i32_0 = arith.constant 0 : i32
    %c0_i32_1 = arith.constant 0 : i32
    %c0_i32_2 = arith.constant 0 : i32
    return %arg0, %c0_i32, %c0_i32_0, %c0_i32_1 : i32, i32, i32, i32
  }
  func.func @transform_2(%arg0: i32) -> (i32, i32, i32, i32) {
    %c0_i32 = arith.constant 0 : i32
    %c0_i32_0 = arith.constant 0 : i32
    %c0_i32_1 = arith.constant 0 : i32
    %c0_i32_2 = arith.constant 0 : i32
    %c0_i32_3 = arith.constant 0 : i32
    return %c0_i32, %c0_i32_0, %c0_i32_1, %c0_i32_2 : i32, i32, i32, i32
  }
  func.func @transform_3(%arg0: i32) -> (i32, i32) {
    %c0_i32 = arith.constant 0 : i32
    %c0_i32_0 = arith.constant 0 : i32
    %c0_i32_1 = arith.constant 0 : i32
    return %c0_i32, %c0_i32_0 : i32, i32
  }
  func.func @transform_4(%arg0: i32) -> (i32, i32, i32, i32) {
    %c0_i32 = arith.constant 0 : i32
    %c0_i32_0 = arith.constant 0 : i32
    %c0_i32_1 = arith.constant 0 : i32
    %c0_i32_2 = arith.constant 0 : i32
    return %arg0, %c0_i32, %c0_i32_0, %c0_i32_1 : i32, i32, i32, i32
  }
}

</mosaic_0001>

<llo_original>
// kernel: _lambda_.1
$region0: #{_lambda_.1}
  #allocation0 [shape = 'u32[]', space=smem, size = 0x4, offset = 0x4, fixed_abs, tag = 'smem constant byte address 0x4 - core index']
  #allocation1 [shape = 'u32[144,128]{1,0:T(1,128)}', space=vmem, size = 0x12000, scoped, tag = 'internal scratch']
  %s0 = inlined_call_operand.vmem [shape: f32[2,4,16,16], index: 0, kind: input, shape index: {}]
  %s1 = inlined_call_operand.vmem [shape: f32[2,4,16,16], index: 1, kind: input, shape index: {}]
  %s2 = inlined_call_operand.vmem [shape: f32[2,4,16,64], index: 2, kind: input, shape index: {}]
  %s3 = inlined_call_operand.vmem [shape: f32[1,64], index: 3, kind: input, shape index: {}]
  %s4 = inlined_call_operand.hbm [shape: f32[2,8,8,8], index: 4, kind: output, shape index: {}]
  %s5 = sld [smem:[#allocation0]]
  $region49: #{_lambda_.1} parent=0
    _
  %s7 = ssub.s32 1, %s5
  %s8 = scalar_select 0, %s7, %s5
  $region1: #{_lambda_.1} parent=0
    #allocation2 [shape = 'u8[65536]{0}', space=vmem, size = 0x10000, scoped, tag = 'output window, operand 0']
    #allocation3 [shape = 's32[2]{0}', space=sflag, size = 0x8, scoped, tag = 'scoped memory for _lambda_.1']
    %9 = vsyncpa [#allocation3], 0
    %s10 = scalar_lea.sflag [#allocation3], 1
    %11 = vsyncpa %s10, 0
    loop: start=0, step=1, limit=4
    $region2: #{_lambda_.1} parent=1 // loop_pre_header
      _
    $region3: #{_lambda_.1} parent=1 // loop_header
      %s13 = sphi 0, %s17
      %p14 = scmp.ge.s32.totalorder %s13, 4
      %s23 = sphi 0, %s25
      %s26 = sphi 0, %s23
      %s27 = sphi 0, %s26
      %s43 = sphi 0, %s27
      %s49 = sphi 0, %s51
      %s52 = sphi 0, %s49
      %s53 = sphi 0, %s52
      %s69 = sphi 0, %s53
      %s73 = sphi 0, %s73
      %s75 = sphi 0, %s73
      %s76 = sphi 0, %s75
      %s90 = sphi 0, %s76
      %s94 = sphi 0, %s94
      %s96 = sphi 0, %s94
      %s97 = sphi 0, %s96
      %s111 = sphi 0, %s97
      %s117 = sphi 0, %s119
      %s120 = sphi 0, %s117
      %s121 = sphi 0, %s120
      %s137 = sphi 0, %s121
    $region4: #{_lambda_.1} parent=1 // loop_header_branch
      %16 = sbr.rel (%p14) target = $region8
    $region5: #{_lambda_.1} parent=1 // loop_body
      %s18 = ssub.s32 %s13, 1
      %s19 = ssub.s32 %s13, 2
      %s20 = sadd.s32 %s13, 1
      %s21 = ssub.s32 %s13, %s20
      %p22 = scmp.eq.s32.totalorder %s21, 0
      %s24 = sadd.s32 %s23, 1
      %s25 = scalar_select %p22, %s23, %s24
      %p28 = pneg %p22
      %p29 = scmp.eq.s32.totalorder %s13, 1
      %p30 = por %p28, %p29
      %p31 = scmp.ne.s32.totalorder %s23, %s26
      %p32 = scmp.eq.s32.totalorder %s13, 0
      %p33 = por %p31, %p32
      %p34 = scmp.ne.s32.totalorder %s23, %s26
      %p35 = scmp.eq.s32.totalorder %s18, 1
      %p36 = por %p34, %p35
      %p37 = scmp.ne.s32.totalorder %s26, %s27
      %p38 = scmp.eq.s32.totalorder %s18, 0
      %p39 = por %p37, %p38
      %p40 = scmp.ne.s32.totalorder %s26, %s27
      %p41 = scmp.eq.s32.totalorder %s19, 1
      %p42 = por %p40, %p41
      %p44 = scmp.ne.s32.totalorder %s27, %s43
      %p45 = scmp.eq.s32.totalorder %s19, 0
      %p46 = por %p44, %p45
      %s47 = ssub.s32 %s13, %s20
      %p48 = scmp.eq.s32.totalorder %s47, 0
      %s50 = sadd.s32 %s49, 1
      %s51 = scalar_select %p48, %s49, %s50
      %p54 = pneg %p48
      %p55 = scmp.eq.s32.totalorder %s13, 1
      %p56 = por %p54, %p55
      %p57 = scmp.ne.s32.totalorder %s49, %s52
      %p58 = scmp.eq.s32.totalorder %s13, 0
      %p59 = por %p57, %p58
      %p60 = scmp.ne.s32.totalorder %s49, %s52
      %p61 = scmp.eq.s32.totalorder %s18, 1
      %p62 = por %p60, %p61
      %p63 = scmp.ne.s32.totalorder %s52, %s53
      %p64 = scmp.eq.s32.totalorder %s18, 0
      %p65 = por %p63, %p64
      %p66 = scmp.ne.s32.totalorder %s52, %s53
      %p67 = scmp.eq.s32.totalorder %s19, 1
      %p68 = por %p66, %p67
      %p70 = scmp.ne.s32.totalorder %s53, %s69
      %p71 = scmp.eq.s32.totalorder %s19, 0
      %p72 = por %p70, %p71
      %s74 = sadd.s32 %s73, 1
      %p77 = scmp.eq.s32.totalorder %s13, 1
      %p78 = scmp.ne.s32.totalorder %s73, %s75
      %p79 = scmp.eq.s32.totalorder %s13, 0
      %p80 = por %p78, %p79
      %p81 = scmp.ne.s32.totalorder %s73, %s75
      %p82 = scmp.eq.s32.totalorder %s18, 1
      %p83 = por %p81, %p82
      %p84 = scmp.ne.s32.totalorder %s75, %s76
      %p85 = scmp.eq.s32.totalorder %s18, 0
      %p86 = por %p84, %p85
      %p87 = scmp.ne.s32.totalorder %s75, %s76
      %p88 = scmp.eq.s32.totalorder %s19, 1
      %p89 = por %p87, %p88
      %p91 = scmp.ne.s32.totalorder %s76, %s90
      %p92 = scmp.eq.s32.totalorder %s19, 0
      %p93 = por %p91, %p92
      %s95 = sadd.s32 %s94, 1
      %p98 = scmp.eq.s32.totalorder %s13, 1
      %p99 = scmp.ne.s32.totalorder %s94, %s96
      %p100 = scmp.eq.s32.totalorder %s13, 0
      %p101 = por %p99, %p100
      %p102 = scmp.ne.s32.totalorder %s94, %s96
      %p103 = scmp.eq.s32.totalorder %s18, 1
      %p104 = por %p102, %p103
      %p105 = scmp.ne.s32.totalorder %s96, %s97
      %p106 = scmp.eq.s32.totalorder %s18, 0
      %p107 = por %p105, %p106
      %p108 = scmp.ne.s32.totalorder %s96, %s97
      %p109 = scmp.eq.s32.totalorder %s19, 1
      %p110 = por %p108, %p109
      %p112 = scmp.ne.s32.totalorder %s97, %s111
      %p113 = scmp.eq.s32.totalorder %s19, 0
      %p114 = por %p112, %p113
      %s115 = ssub.s32 %s13, %s20
      %p116 = scmp.eq.s32.totalorder %s115, 0
      %s118 = sadd.s32 %s117, 1
      %s119 = scalar_select %p116, %s117, %s118
      %p122 = pneg %p116
      %p123 = scmp.eq.s32.totalorder %s13, 1
      %p124 = por %p122, %p123
      %p125 = scmp.ne.s32.totalorder %s117, %s120
      %p126 = scmp.eq.s32.totalorder %s13, 0
      %p127 = por %p125, %p126
      %p128 = scmp.ne.s32.totalorder %s117, %s120
      %p129 = scmp.eq.s32.totalorder %s18, 1
      %p130 = por %p128, %p129
      %p131 = scmp.ne.s32.totalorder %s120, %s121
      %p132 = scmp.eq.s32.totalorder %s18, 0
      %p133 = por %p131, %p132
      %p134 = scmp.ne.s32.totalorder %s120, %s121
      %p135 = scmp.eq.s32.totalorder %s19, 1
      %p136 = por %p134, %p135
      %p138 = scmp.ne.s32.totalorder %s121, %s137
      %p139 = scmp.eq.s32.totalorder %s19, 0
      %p140 = por %p138, %p139
      %p141 = scmp.le.s32.totalorder 1, %s13
      %p142 = scmp.lt.s32.totalorder %s13, 3
      %p143 = pnand %p141, %p142
      %p144 = pneg %p143
      // Predicated region
      $region9: #{_lambda_.1} parent=5 // pred_check
        _
      $region10: #{_lambda_.1} parent=5 // pred_check_branch
        %146 = sbr.rel (%p143) target = $region12
      $region11: #{_lambda_.1} parent=5 // pred_region
        %s147 = ssub.s32 %s13, 1
        // Predicated region
        $region13: #{_lambda_.1} parent=11 // pred_check
          %p148 = pneg %p86
        $region14: #{_lambda_.1} parent=11 // pred_check_branch
          %150 = sbr.rel (%p148) target = $region16
        $region15: #{_lambda_.1} parent=11 // pred_region
          _
        $region16: #{_lambda_.1} parent=11 // pred_fallthru
          _
        // Predicated region
        $region17: #{_lambda_.1} parent=11 // pred_check
          %p151 = pneg %p107
        $region18: #{_lambda_.1} parent=11 // pred_check_branch
          %153 = sbr.rel (%p151) target = $region20
        $region19: #{_lambda_.1} parent=11 // pred_region
          _
        $region20: #{_lambda_.1} parent=11 // pred_fallthru
          _
      $region12: #{_lambda_.1} parent=5 // pred_fallthru
        _
      %p154 = scmp.lt.s32.totalorder %s13, 2
      // Predicated region
      $region21: #{_lambda_.1} parent=5 // pred_check
        %p155 = pneg %p154
      $region22: #{_lambda_.1} parent=5 // pred_check_branch
        %157 = sbr.rel (%p155) target = $region24
      $region23: #{_lambda_.1} parent=5 // pred_region
        // Predicated region
        $region25: #{_lambda_.1} parent=23 // pred_check
          %p158 = pneg %p33
        $region26: #{_lambda_.1} parent=23 // pred_check_branch
          %160 = sbr.rel (%p158) target = $region28
        $region27: #{_lambda_.1} parent=23 // pred_region
          %p161 = scmp.lt.s32.totalorder %s13, 1
          %s162 = scalar_select %p161, %s13, 1
          %s163 = smul.addr %s162, 8
          %s164 = smul.addr %s163, 8
          %s165 = scalar_lea.vmem %s0, %s164
        $region28: #{_lambda_.1} parent=23 // pred_fallthru
          _
        // Predicated region
        $region29: #{_lambda_.1} parent=23 // pred_check
          %p166 = pneg %p59
        $region30: #{_lambda_.1} parent=23 // pred_check_branch
          %168 = sbr.rel (%p166) target = $region32
        $region31: #{_lambda_.1} parent=23 // pred_region
          %p169 = scmp.lt.s32.totalorder %s13, 1
          %s170 = scalar_select %p169, %s13, 1
          %s171 = smul.addr %s170, 8
          %s172 = smul.addr %s171, 8
          %s173 = scalar_lea.vmem %s1, %s172
        $region32: #{_lambda_.1} parent=23 // pred_fallthru
          _
      $region24: #{_lambda_.1} parent=5 // pred_fallthru
        _
      %p174 = scmp.le.s32.totalorder 1, %s13
      %p175 = scmp.lt.s32.totalorder %s13, 3
      %p176 = pnand %p174, %p175
      %p177 = pneg %p176
      // Predicated region
      $region33: #{_lambda_.1} parent=5 // pred_check
        _
      $region34: #{_lambda_.1} parent=5 // pred_check_branch
        %179 = sbr.rel (%p176) target = $region36
      $region35: #{_lambda_.1} parent=5 // pred_region
        %s180 = ssub.s32 %s13, 1
        %p181 = scmp.lt.s32.totalorder %s18, 1
        %s182 = scalar_select %p181, %s18, 1
        %s183 = smul.addr %s182, 8
        %s184 = smul.addr %s183, 8
        %s185 = scalar_lea.vmem %s0, %s184
        %p186 = pneg %p39
        %p187 = pneg %p36
        %p188 = scmp.lt.s32.totalorder %s18, 1
        %s189 = scalar_select %p188, %s18, 1
        %s190 = smul.addr %s189, 8
        %s191 = smul.addr %s190, 8
        %s192 = scalar_lea.vmem %s1, %s191
        %p193 = pneg %p65
        %p194 = pneg %p62
        %p195 = pneg %p86
        %p196 = pneg %p83
        %p197 = pneg %p107
        %p198 = pneg %p104
        %p199 = pneg %p133
        %p200 = pneg %p130
        %s201 = sand.u32 %s120, 1
        %s202 = scalar_lea.sflag [#allocation3], %s201
        %s203 = sand.u32 %s120, 1
        %s204 = smul.addr %s203, 64
        %s205 = scalar_lea.vmem [#allocation2], %s204
        %p206 = scmp.lt.s32.totalorder %s18, 1
        %s207 = scalar_select %p206, %s18, 1
        %s208 = smul.addr %s207, 8
        %s209 = smul.addr %s208, 8
        %s210 = scalar_lea.vmem %s0, %s209
        %p211 = scmp.lt.s32.totalorder %s18, 1
        %s212 = scalar_select %p211, %s18, 1
        %s213 = smul.addr %s212, 8
        %s214 = smul.addr %s213, 8
        %s215 = scalar_lea.vmem %s1, %s214
        %v216 = vld [vmem:[%s215] sm:$0xff]
        %v217 = vld [vmem:[%s215 + $0x8] sm:$0xff]
        %v218 = vld [vmem:[%s215 + $0x10] sm:$0xff]
        %v219 = vld [vmem:[%s215 + $0x18] sm:$0xff]
        %v220 = vld [vmem:[%s215 + $0x20] sm:$0xff]
        %v221 = vld [vmem:[%s215 + $0x28] sm:$0xff]
        %v222 = vld [vmem:[%s215 + $0x30] sm:$0xff]
        %v223 = vld [vmem:[%s215 + $0x38] sm:$0xff]
        %vm224 = vcmp.gt.f32.partialorder %v216, -0.1
        %vm225 = vcmp.gt.f32.partialorder %v217, -0.1
        %vm226 = vcmp.gt.f32.partialorder %v218, -0.1
        %vm227 = vcmp.gt.f32.partialorder %v219, -0.1
        %vm228 = vcmp.gt.f32.partialorder %v220, -0.1
        %vm229 = vcmp.gt.f32.partialorder %v221, -0.1
        %vm230 = vcmp.gt.f32.partialorder %v222, -0.1
        %vm231 = vcmp.gt.f32.partialorder %v223, -0.1
        %v232 = vld [vmem:[%s210] sm:$0xff]
        %v233 = vld [vmem:[%s210 + $0x8] sm:$0xff]
        %v234 = vld [vmem:[%s210 + $0x10] sm:$0xff]
        %v235 = vld [vmem:[%s210 + $0x18] sm:$0xff]
        %v236 = vld [vmem:[%s210 + $0x20] sm:$0xff]
        %v237 = vld [vmem:[%s210 + $0x28] sm:$0xff]
        %v238 = vld [vmem:[%s210 + $0x30] sm:$0xff]
        %v239 = vld [vmem:[%s210 + $0x38] sm:$0xff]
        %v240 = vsel %vm224, %v232, 0.0
        %v241 = vsel %vm225, %v233, 0.0
        %v242 = vsel %vm226, %v234, 0.0
        %v243 = vsel %vm227, %v235, 0.0
        %v244 = vsel %vm228, %v236, 0.0
        %v245 = vsel %vm229, %v237, 0.0
        %v246 = vsel %vm230, %v238, 0.0
        %v247 = vsel %vm231, %v239, 0.0
        %v248 = vlaneseq
        %v249 = vshrl.u32 %v248, 7
        %v250 = vlaneseq
        %v251 = vand.u32 %v250, 127
        %v252 = vld [vmem:[%s2] sm:$0xff]
        %v253 = vld [vmem:[%s2 + $0x8] sm:$0xff]
        %v254 = vld [vmem:[%s2 + $0x10] sm:$0xff]
        %v255 = vld [vmem:[%s2 + $0x18] sm:$0xff]
        %v256 = vld [vmem:[%s2 + $0x20] sm:$0xff]
        %v257 = vld [vmem:[%s2 + $0x28] sm:$0xff]
        %v258 = vld [vmem:[%s2 + $0x30] sm:$0xff]
        %v259 = vld [vmem:[%s2 + $0x38] sm:$0xff]
        %vm260 = vcmask 130048
        %v262 = vsel %vm260, %v240, 0
        %v265 = vsel %vm260, %v241, 0
        %267 = vmatprep.subr.mxu0 0.0
        %268 = vmatpush1.msra.mxu0 %v252
        %269 = vmatprep.subr.mxu0 0.0
        %270 = vmatpush1.msra.mxu0 %v253
        %271 = vmatprep.subr.mxu0 0.0
        %272 = vmatpush1.msra.mxu0 0.0
        %273 = vmatprep.subr.mxu0 0.0
        %274 = vmatpush1.msra.mxu0 0.0
        %275 = vmatprep.subr.mxu0 0.0
        %276 = vmatpush1.msra.mxu0 0.0
        %277 = vmatprep.subr.mxu0 0.0
        %278 = vmatpush1.msra.mxu0 0.0
        %279 = vmatprep.subr.mxu0 0.0
        %280 = vmatpush1.msra.mxu0 0.0
        %281 = vmatprep.subr.mxu0 0.0
        %282 = vmatpush1.msra.mxu0 0.0
        %283 = vmatprep.subr.mxu0 0.0
        %284 = vmatpush1.msra.mxu0 0.0
        %285 = vmatprep.subr.mxu0 0.0
        %286 = vmatpush1.msra.mxu0 0.0
        %287 = vmatprep.subr.mxu0 0.0
        %288 = vmatpush1.msra.mxu0 0.0
        %289 = vmatprep.subr.mxu0 0.0
        %290 = vmatpush1.msra.mxu0 0.0
        %291 = vmatprep.subr.mxu0 0.0
        %292 = vmatpush1.msra.mxu0 0.0
        %293 = vmatprep.subr.mxu0 0.0
        %294 = vmatpush1.msra.mxu0 0.0
        %295 = vmatprep.subr.mxu0 0.0
        %296 = vmatpush1.msra.mxu0 0.0
        %297 = vmatprep.subr.mxu0 0.0
        %298 = vmatpush1.msra.mxu0 0.0
        %299 = vmatprep.subr.mxu0 0.0
        %300 = vmatpush1.msra.mxu0 0.0
        %301 = vmatprep.subr.mxu0 0.0
        %302 = vmatpush1.msra.mxu0 0.0
        %303 = vmatprep.subr.mxu0 0.0
        %304 = vmatpush1.msra.mxu0 0.0
        %305 = vmatprep.subr.mxu0 0.0
        %306 = vmatpush1.msra.mxu0 0.0
        %307 = vmatprep.subr.mxu0 0.0
        %308 = vmatpush1.msra.mxu0 0.0
        %309 = vmatprep.subr.mxu0 0.0
        %310 = vmatpush1.msra.mxu0 0.0
        %311 = vmatprep.subr.mxu0 0.0
        %312 = vmatpush1.msra.mxu0 0.0
        %313 = vmatprep.subr.mxu0 0.0
        %314 = vmatpush1.msra.mxu0 0.0
        %315 = vmatprep.subr.mxu0 0.0
        %316 = vmatpush1.msra.mxu0 0.0
        %317 = vmatprep.subr.mxu0 0.0
        %318 = vmatpush1.msra.mxu0 0.0
        %319 = vmatprep.subr.mxu0 0.0
        %320 = vmatpush1.msra.mxu0 0.0
        %321 = vmatprep.subr.mxu0 0.0
        %322 = vmatpush1.msra.mxu0 0.0
        %323 = vmatprep.subr.mxu0 0.0
        %324 = vmatpush1.msra.mxu0 0.0
        %325 = vmatprep.subr.mxu0 0.0
        %326 = vmatpush1.msra.mxu0 0.0
        %327 = vmatprep.subr.mxu0 0.0
        %328 = vmatpush1.msra.mxu0 0.0
        %329 = vmatprep.subr.mxu0 0.0
        %330 = vmatpush1.msra.mxu0 0.0
        %331 = vmatprep.mubr.f32.mxu0 0.0
        %332 = vmatmul.mubr.f32.gmra.mrb[0].mxu0 %v262
        %v333 = vpop.f32.mrb[0].mxu0
        %v334 = vadd.f32 0.0, %v333
        %v335 = vpop.f32.mrb[0].mxu0
        %336 = vmatprep.mubr.f32.mxu0 0.0
        %337 = vmatmul.mubr.f32.gmra.mrb[0].mxu0 %v265
        %v338 = vpop.f32.mrb[0].mxu0
        %v339 = vadd.f32 0.0, %v338
        %v340 = vpop.f32.mrb[0].mxu0
        %341 = vdwg.mxu0
        %v343 = vsel %vm260, %v242, 0
        %v346 = vsel %vm260, %v243, 0
        %348 = vmatprep.subr.mxu0 0.0
        %349 = vmatpush1.msra.mxu0 %v254
        %350 = vmatprep.subr.mxu0 0.0
        %351 = vmatpush1.msra.mxu0 %v255
        %352 = vmatprep.subr.mxu0 0.0
        %353 = vmatpush1.msra.mxu0 0.0
        %354 = vmatprep.subr.mxu0 0.0
        %355 = vmatpush1.msra.mxu0 0.0
        %356 = vmatprep.subr.mxu0 0.0
        %357 = vmatpush1.msra.mxu0 0.0
        %358 = vmatprep.subr.mxu0 0.0
        %359 = vmatpush1.msra.mxu0 0.0
        %360 = vmatprep.subr.mxu0 0.0
        %361 = vmatpush1.msra.mxu0 0.0
        %362 = vmatprep.subr.mxu0 0.0
        %363 = vmatpush1.msra.mxu0 0.0
        %364 = vmatprep.subr.mxu0 0.0
        %365 = vmatpush1.msra.mxu0 0.0
        %366 = vmatprep.subr.mxu0 0.0
        %367 = vmatpush1.msra.mxu0 0.0
        %368 = vmatprep.subr.mxu0 0.0
        %369 = vmatpush1.msra.mxu0 0.0
        %370 = vmatprep.subr.mxu0 0.0
        %371 = vmatpush1.msra.mxu0 0.0
        %372 = vmatprep.subr.mxu0 0.0
        %373 = vmatpush1.msra.mxu0 0.0
        %374 = vmatprep.subr.mxu0 0.0
        %375 = vmatpush1.msra.mxu0 0.0
        %376 = vmatprep.subr.mxu0 0.0
        %377 = vmatpush1.msra.mxu0 0.0
        %378 = vmatprep.subr.mxu0 0.0
        %379 = vmatpush1.msra.mxu0 0.0
        %380 = vmatprep.subr.mxu0 0.0
        %381 = vmatpush1.msra.mxu0 0.0
        %382 = vmatprep.subr.mxu0 0.0
        %383 = vmatpush1.msra.mxu0 0.0
        %384 = vmatprep.subr.mxu0 0.0
        %385 = vmatpush1.msra.mxu0 0.0
        %386 = vmatprep.subr.mxu0 0.0
        %387 = vmatpush1.msra.mxu0 0.0
        %388 = vmatprep.subr.mxu0 0.0
        %389 = vmatpush1.msra.mxu0 0.0
        %390 = vmatprep.subr.mxu0 0.0
        %391 = vmatpush1.msra.mxu0 0.0
        %392 = vmatprep.subr.mxu0 0.0
        %393 = vmatpush1.msra.mxu0 0.0
        %394 = vmatprep.subr.mxu0 0.0
        %395 = vmatpush1.msra.mxu0 0.0
        %396 = vmatprep.subr.mxu0 0.0
        %397 = vmatpush1.msra.mxu0 0.0
        %398 = vmatprep.subr.mxu0 0.0
        %399 = vmatpush1.msra.mxu0 0.0
        %400 = vmatprep.subr.mxu0 0.0
        %401 = vmatpush1.msra.mxu0 0.0
        %402 = vmatprep.subr.mxu0 0.0
        %403 = vmatpush1.msra.mxu0 0.0
        %404 = vmatprep.subr.mxu0 0.0
        %405 = vmatpush1.msra.mxu0 0.0
        %406 = vmatprep.subr.mxu0 0.0
        %407 = vmatpush1.msra.mxu0 0.0
        %408 = vmatprep.subr.mxu0 0.0
        %409 = vmatpush1.msra.mxu0 0.0
        %410 = vmatprep.subr.mxu0 0.0
        %411 = vmatpush1.msra.mxu0 0.0
        %412 = vmatprep.mubr.f32.mxu0 0.0
        %413 = vmatmul.mubr.f32.gmra.mrb[0].mxu0 %v343
        %v414 = vpop.f32.mrb[0].mxu0
        %v415 = vadd.f32 0.0, %v414
        %v416 = vpop.f32.mrb[0].mxu0
        %417 = vmatprep.mubr.f32.mxu0 0.0
        %418 = vmatmul.mubr.f32.gmra.mrb[0].mxu0 %v346
        %v419 = vpop.f32.mrb[0].mxu0
        %v420 = vadd.f32 0.0, %v419
        %v421 = vpop.f32.mrb[0].mxu0
        %422 = vdwg.mxu0
        %v424 = vsel %vm260, %v244, 0
        %v427 = vsel %vm260, %v245, 0
        %429 = vmatprep.subr.mxu0 0.0
        %430 = vmatpush1.msra.mxu0 %v256
        %431 = vmatprep.subr.mxu0 0.0
        %432 = vmatpush1.msra.mxu0 %v257
        %433 = vmatprep.subr.mxu0 0.0
        %434 = vmatpush1.msra.mxu0 0.0
        %435 = vmatprep.subr.mxu0 0.0
        %436 = vmatpush1.msra.mxu0 0.0
        %437 = vmatprep.subr.mxu0 0.0
        %438 = vmatpush1.msra.mxu0 0.0
        %439 = vmatprep.subr.mxu0 0.0
        %440 = vmatpush1.msra.mxu0 0.0
        %441 = vmatprep.subr.mxu0 0.0
        %442 = vmatpush1.msra.mxu0 0.0
        %443 = vmatprep.subr.mxu0 0.0
        %444 = vmatpush1.msra.mxu0 0.0
        %445 = vmatprep.subr.mxu0 0.0
        %446 = vmatpush1.msra.mxu0 0.0
        %447 = vmatprep.subr.mxu0 0.0
        %448 = vmatpush1.msra.mxu0 0.0
        %449 = vmatprep.subr.mxu0 0.0
        %450 = vmatpush1.msra.mxu0 0.0
        %451 = vmatprep.subr.mxu0 0.0
        %452 = vmatpush1.msra.mxu0 0.0
        %453 = vmatprep.subr.mxu0 0.0
        %454 = vmatpush1.msra.mxu0 0.0
        %455 = vmatprep.subr.mxu0 0.0
        %456 = vmatpush1.msra.mxu0 0.0
        %457 = vmatprep.subr.mxu0 0.0
        %458 = vmatpush1.msra.mxu0 0.0
        %459 = vmatprep.subr.mxu0 0.0
        %460 = vmatpush1.msra.mxu0 0.0
        %461 = vmatprep.subr.mxu0 0.0
        %462 = vmatpush1.msra.mxu0 0.0
        %463 = vmatprep.subr.mxu0 0.0
        %464 = vmatpush1.msra.mxu0 0.0
        %465 = vmatprep.subr.mxu0 0.0
        %466 = vmatpush1.msra.mxu0 0.0
        %467 = vmatprep.subr.mxu0 0.0
        %468 = vmatpush1.msra.mxu0 0.0
        %469 = vmatprep.subr.mxu0 0.0
        %470 = vmatpush1.msra.mxu0 0.0
        %471 = vmatprep.subr.mxu0 0.0
        %472 = vmatpush1.msra.mxu0 0.0
        %473 = vmatprep.subr.mxu0 0.0
        %474 = vmatpush1.msra.mxu0 0.0
        %475 = vmatprep.subr.mxu0 0.0
        %476 = vmatpush1.msra.mxu0 0.0
        %477 = vmatprep.subr.mxu0 0.0
        %478 = vmatpush1.msra.mxu0 0.0
        %479 = vmatprep.subr.mxu0 0.0
        %480 = vmatpush1.msra.mxu0 0.0
        %481 = vmatprep.subr.mxu0 0.0
        %482 = vmatpush1.msra.mxu0 0.0
        %483 = vmatprep.subr.mxu0 0.0
        %484 = vmatpush1.msra.mxu0 0.0
        %485 = vmatprep.subr.mxu0 0.0
        %486 = vmatpush1.msra.mxu0 0.0
        %487 = vmatprep.subr.mxu0 0.0
        %488 = vmatpush1.msra.mxu0 0.0
        %489 = vmatprep.subr.mxu0 0.0
        %490 = vmatpush1.msra.mxu0 0.0
        %491 = vmatprep.subr.mxu0 0.0
        %492 = vmatpush1.msra.mxu0 0.0
        %493 = vmatprep.mubr.f32.mxu0 0.0
        %494 = vmatmul.mubr.f32.gmra.mrb[0].mxu0 %v424
        %v495 = vpop.f32.mrb[0].mxu0
        %v496 = vadd.f32 0.0, %v495
        %v497 = vpop.f32.mrb[0].mxu0
        %498 = vmatprep.mubr.f32.mxu0 0.0
        %499 = vmatmul.mubr.f32.gmra.mrb[0].mxu0 %v427
        %v500 = vpop.f32.mrb[0].mxu0
        %v501 = vadd.f32 0.0, %v500
        %v502 = vpop.f32.mrb[0].mxu0
        %503 = vdwg.mxu0
        %v505 = vsel %vm260, %v246, 0
        %v508 = vsel %vm260, %v247, 0
        %510 = vmatprep.subr.mxu0 0.0
        %511 = vmatpush1.msra.mxu0 %v258
        %512 = vmatprep.subr.mxu0 0.0
        %513 = vmatpush1.msra.mxu0 %v259
        %514 = vmatprep.subr.mxu0 0.0
        %515 = vmatpush1.msra.mxu0 0.0
        %516 = vmatprep.subr.mxu0 0.0
        %517 = vmatpush1.msra.mxu0 0.0
        %518 = vmatprep.subr.mxu0 0.0
        %519 = vmatpush1.msra.mxu0 0.0
        %520 = vmatprep.subr.mxu0 0.0
        %521 = vmatpush1.msra.mxu0 0.0
        %522 = vmatprep.subr.mxu0 0.0
        %523 = vmatpush1.msra.mxu0 0.0
        %524 = vmatprep.subr.mxu0 0.0
        %525 = vmatpush1.msra.mxu0 0.0
        %526 = vmatprep.subr.mxu0 0.0
        %527 = vmatpush1.msra.mxu0 0.0
        %528 = vmatprep.subr.mxu0 0.0
        %529 = vmatpush1.msra.mxu0 0.0
        %530 = vmatprep.subr.mxu0 0.0
        %531 = vmatpush1.msra.mxu0 0.0
        %532 = vmatprep.subr.mxu0 0.0
        %533 = vmatpush1.msra.mxu0 0.0
        %534 = vmatprep.subr.mxu0 0.0
        %535 = vmatpush1.msra.mxu0 0.0
        %536 = vmatprep.subr.mxu0 0.0
        %537 = vmatpush1.msra.mxu0 0.0
        %538 = vmatprep.subr.mxu0 0.0
        %539 = vmatpush1.msra.mxu0 0.0
        %540 = vmatprep.subr.mxu0 0.0
        %541 = vmatpush1.msra.mxu0 0.0
        %542 = vmatprep.subr.mxu0 0.0
        %543 = vmatpush1.msra.mxu0 0.0
        %544 = vmatprep.subr.mxu0 0.0
        %545 = vmatpush1.msra.mxu0 0.0
        %546 = vmatprep.subr.mxu0 0.0
        %547 = vmatpush1.msra.mxu0 0.0
        %548 = vmatprep.subr.mxu0 0.0
        %549 = vmatpush1.msra.mxu0 0.0
        %550 = vmatprep.subr.mxu0 0.0
        %551 = vmatpush1.msra.mxu0 0.0
        %552 = vmatprep.subr.mxu0 0.0
        %553 = vmatpush1.msra.mxu0 0.0
        %554 = vmatprep.subr.mxu0 0.0
        %555 = vmatpush1.msra.mxu0 0.0
        %556 = vmatprep.subr.mxu0 0.0
        %557 = vmatpush1.msra.mxu0 0.0
        %558 = vmatprep.subr.mxu0 0.0
        %559 = vmatpush1.msra.mxu0 0.0
        %560 = vmatprep.subr.mxu0 0.0
        %561 = vmatpush1.msra.mxu0 0.0
        %562 = vmatprep.subr.mxu0 0.0
        %563 = vmatpush1.msra.mxu0 0.0
        %564 = vmatprep.subr.mxu0 0.0
        %565 = vmatpush1.msra.mxu0 0.0
        %566 = vmatprep.subr.mxu0 0.0
        %567 = vmatpush1.msra.mxu0 0.0
        %568 = vmatprep.subr.mxu0 0.0
        %569 = vmatpush1.msra.mxu0 0.0
        %570 = vmatprep.subr.mxu0 0.0
        %571 = vmatpush1.msra.mxu0 0.0
        %572 = vmatprep.subr.mxu0 0.0
        %573 = vmatpush1.msra.mxu0 0.0
        %574 = vmatprep.mubr.f32.mxu0 0.0
        %575 = vmatmul.mubr.f32.gmra.mrb[0].mxu0 %v505
        %v576 = vpop.f32.mrb[0].mxu0
        %v577 = vadd.f32 0.0, %v576
        %v578 = vpop.f32.mrb[0].mxu0
        %579 = vmatprep.mubr.f32.mxu0 0.0
        %580 = vmatmul.mubr.f32.gmra.mrb[0].mxu0 %v508
        %v581 = vpop.f32.mrb[0].mxu0
        %v582 = vadd.f32 0.0, %v581
        %v583 = vpop.f32.mrb[0].mxu0
        %584 = vdwg.mxu0
        %vm585 = vcmask 523264
        %v586 = vsel %vm585, %v334, 0.0
        %v587 = vsel %vm585, %v415, 0.0
        %v588 = vadd.f32 %v586, %v587
        %v589 = vsel %vm585, %v496, 0.0
        %v590 = vadd.f32 %v588, %v589
        %v591 = vsel %vm585, %v577, 0.0
        %v592 = vadd.f32 %v590, %v591
        %v593 = vsel %vm585, %v339, 0.0
        %v594 = vsel %vm585, %v420, 0.0
        %v595 = vadd.f32 %v593, %v594
        %v596 = vsel %vm585, %v501, 0.0
        %v597 = vadd.f32 %v595, %v596
        %v598 = vsel %vm585, %v582, 0.0
        %v599 = vadd.f32 %v597, %v598
        %v600 = vmul.u32 %v249, 2
        %vm601 = vcmp.eq.s32.totalorder %v251, %v600
        %v602 = vsel %vm601, 1, 0
        %v603 = vcvt.s32.f32 %v602
        %s604 = scalar_lea.vmem %s2, 64
        %v605 = vld [vmem:[%s604] sm:$0xff]
        %v606 = vld [vmem:[%s604 + $0x8] sm:$0xff]
        %v607 = vld [vmem:[%s604 + $0x10] sm:$0xff]
        %v608 = vld [vmem:[%s604 + $0x18] sm:$0xff]
        %v609 = vld [vmem:[%s604 + $0x20] sm:$0xff]
        %v610 = vld [vmem:[%s604 + $0x28] sm:$0xff]
        %v611 = vld [vmem:[%s604 + $0x30] sm:$0xff]
        %v612 = vld [vmem:[%s604 + $0x38] sm:$0xff]
        %613 = vmatprep.subr.mxu0 0.0
        %614 = vmatpush1.msra.mxu0 %v605
        %615 = vmatprep.subr.mxu0 0.0
        %616 = vmatpush1.msra.mxu0 %v606
        %617 = vmatprep.subr.mxu0 0.0
        %618 = vmatpush1.msra.mxu0 0.0
        %619 = vmatprep.subr.mxu0 0.0
        %620 = vmatpush1.msra.mxu0 0.0
        %621 = vmatprep.subr.mxu0 0.0
        %622 = vmatpush1.msra.mxu0 0.0
        %623 = vmatprep.subr.mxu0 0.0
        %624 = vmatpush1.msra.mxu0 0.0
        %625 = vmatprep.subr.mxu0 0.0
        %626 = vmatpush1.msra.mxu0 0.0
        %627 = vmatprep.subr.mxu0 0.0
        %628 = vmatpush1.msra.mxu0 0.0
        %629 = vmatprep.subr.mxu0 0.0
        %630 = vmatpush1.msra.mxu0 0.0
        %631 = vmatprep.subr.mxu0 0.0
        %632 = vmatpush1.msra.mxu0 0.0
        %633 = vmatprep.subr.mxu0 0.0
        %634 = vmatpush1.msra.mxu0 0.0
        %635 = vmatprep.subr.mxu0 0.0
        %636 = vmatpush1.msra.mxu0 0.0
        %637 = vmatprep.subr.mxu0 0.0
        %638 = vmatpush1.msra.mxu0 0.0
        %639 = vmatprep.subr.mxu0 0.0
        %640 = vmatpush1.msra.mxu0 0.0
        %641 = vmatprep.subr.mxu0 0.0
        %642 = vmatpush1.msra.mxu0 0.0
        %643 = vmatprep.subr.mxu0 0.0
        %644 = vmatpush1.msra.mxu0 0.0
        %645 = vmatprep.subr.mxu0 0.0
        %646 = vmatpush1.msra.mxu0 0.0
        %647 = vmatprep.subr.mxu0 0.0
        %648 = vmatpush1.msra.mxu0 0.0
        %649 = vmatprep.subr.mxu0 0.0
        %650 = vmatpush1.msra.mxu0 0.0
        %651 = vmatprep.subr.mxu0 0.0
        %652 = vmatpush1.msra.mxu0 0.0
        %653 = vmatprep.subr.mxu0 0.0
        %654 = vmatpush1.msra.mxu0 0.0
        %655 = vmatprep.subr.mxu0 0.0
        %656 = vmatpush1.msra.mxu0 0.0
        %657 = vmatprep.subr.mxu0 0.0
        %658 = vmatpush1.msra.mxu0 0.0
        %659 = vmatprep.subr.mxu0 0.0
        %660 = vmatpush1.msra.mxu0 0.0
        %661 = vmatprep.subr.mxu0 0.0
        %662 = vmatpush1.msra.mxu0 0.0
        %663 = vmatprep.subr.mxu0 0.0
        %664 = vmatpush1.msra.mxu0 0.0
        %665 = vmatprep.subr.mxu0 0.0
        %666 = vmatpush1.msra.mxu0 0.0
        %667 = vmatprep.subr.mxu0 0.0
        %668 = vmatpush1.msra.mxu0 0.0
        %669 = vmatprep.subr.mxu0 0.0
        %670 = vmatpush1.msra.mxu0 0.0
        %671 = vmatprep.subr.mxu0 0.0
        %672 = vmatpush1.msra.mxu0 0.0
        %673 = vmatprep.subr.mxu0 0.0
        %674 = vmatpush1.msra.mxu0 0.0
        %675 = vmatprep.subr.mxu0 0.0
        %676 = vmatpush1.msra.mxu0 0.0
        %677 = vmatprep.mubr.f32.mxu0 0.0
        %678 = vmatmul.mubr.f32.gmra.mrb[0].mxu0 %v262
        %v679 = vpop.f32.mrb[0].mxu0
        %v680 = vadd.f32 0.0, %v679
        %v681 = vpop.f32.mrb[0].mxu0
        %682 = vmatprep.mubr.f32.mxu0 0.0
        %683 = vmatmul.mubr.f32.gmra.mrb[0].mxu0 %v265
        %v684 = vpop.f32.mrb[0].mxu0
        %v685 = vadd.f32 0.0, %v684
        %v686 = vpop.f32.mrb[0].mxu0
        %687 = vdwg.mxu0
        %688 = vmatprep.subr.mxu0 0.0
        %689 = vmatpush1.msra.mxu0 %v607
        %690 = vmatprep.subr.mxu0 0.0
        %691 = vmatpush1.msra.mxu0 %v608
        %692 = vmatprep.subr.mxu0 0.0
        %693 = vmatpush1.msra.mxu0 0.0
        %694 = vmatprep.subr.mxu0 0.0
        %695 = vmatpush1.msra.mxu0 0.0
        %696 = vmatprep.subr.mxu0 0.0
        %697 = vmatpush1.msra.mxu0 0.0
        %698 = vmatprep.subr.mxu0 0.0
        %699 = vmatpush1.msra.mxu0 0.0
        %700 = vmatprep.subr.mxu0 0.0
        %701 = vmatpush1.msra.mxu0 0.0
        %702 = vmatprep.subr.mxu0 0.0
        %703 = vmatpush1.msra.mxu0 0.0
        %704 = vmatprep.subr.mxu0 0.0
        %705 = vmatpush1.msra.mxu0 0.0
        %706 = vmatprep.subr.mxu0 0.0
        %707 = vmatpush1.msra.mxu0 0.0
        %708 = vmatprep.subr.mxu0 0.0
        %709 = vmatpush1.msra.mxu0 0.0
        %710 = vmatprep.subr.mxu0 0.0
        %711 = vmatpush1.msra.mxu0 0.0
        %712 = vmatprep.subr.mxu0 0.0
        %713 = vmatpush1.msra.mxu0 0.0
        %714 = vmatprep.subr.mxu0 0.0
        %715 = vmatpush1.msra.mxu0 0.0
        %716 = vmatprep.subr.mxu0 0.0
        %717 = vmatpush1.msra.mxu0 0.0
        %718 = vmatprep.subr.mxu0 0.0
        %719 = vmatpush1.msra.mxu0 0.0
        %720 = vmatprep.subr.mxu0 0.0
        %721 = vmatpush1.msra.mxu0 0.0
        %722 = vmatprep.subr.mxu0 0.0
        %723 = vmatpush1.msra.mxu0 0.0
        %724 = vmatprep.subr.mxu0 0.0
        %725 = vmatpush1.msra.mxu0 0.0
        %726 = vmatprep.subr.mxu0 0.0
        %727 = vmatpush1.msra.mxu0 0.0
        %728 = vmatprep.subr.mxu0 0.0
        %729 = vmatpush1.msra.mxu0 0.0
        %730 = vmatprep.subr.mxu0 0.0
        %731 = vmatpush1.msra.mxu0 0.0
        %732 = vmatprep.subr.mxu0 0.0
        %733 = vmatpush1.msra.mxu0 0.0
        %734 = vmatprep.subr.mxu0 0.0
        %735 = vmatpush1.msra.mxu0 0.0
        %736 = vmatprep.subr.mxu0 0.0
        %737 = vmatpush1.msra.mxu0 0.0
        %738 = vmatprep.subr.mxu0 0.0
        %739 = vmatpush1.msra.mxu0 0.0
        %740 = vmatprep.subr.mxu0 0.0
        %741 = vmatpush1.msra.mxu0 0.0
        %742 = vmatprep.subr.mxu0 0.0
        %743 = vmatpush1.msra.mxu0 0.0
        %744 = vmatprep.subr.mxu0 0.0
        %745 = vmatpush1.msra.mxu0 0.0
        %746 = vmatprep.subr.mxu0 0.0
        %747 = vmatpush1.msra.mxu0 0.0
        %748 = vmatprep.subr.mxu0 0.0
        %749 = vmatpush1.msra.mxu0 0.0
        %750 = vmatprep.subr.mxu0 0.0
        %751 = vmatpush1.msra.mxu0 0.0
        %752 = vmatprep.mubr.f32.mxu0 0.0
        %753 = vmatmul.mubr.f32.gmra.mrb[0].mxu0 %v343
        %v754 = vpop.f32.mrb[0].mxu0
        %v755 = vadd.f32 0.0, %v754
        %v756 = vpop.f32.mrb[0].mxu0
        %757 = vmatprep.mubr.f32.mxu0 0.0
        %758 = vmatmul.mubr.f32.gmra.mrb[0].mxu0 %v346
        %v759 = vpop.f32.mrb[0].mxu0
        %v760 = vadd.f32 0.0, %v759
        %v761 = vpop.f32.mrb[0].mxu0
        %762 = vdwg.mxu0
        %763 = vmatprep.subr.mxu0 0.0
        %764 = vmatpush1.msra.mxu0 %v609
        %765 = vmatprep.subr.mxu0 0.0
        %766 = vmatpush1.msra.mxu0 %v610
        %767 = vmatprep.subr.mxu0 0.0
        %768 = vmatpush1.msra.mxu0 0.0
        %769 = vmatprep.subr.mxu0 0.0
        %770 = vmatpush1.msra.mxu0 0.0
        %771 = vmatprep.subr.mxu0 0.0
        %772 = vmatpush1.msra.mxu0 0.0
        %773 = vmatprep.subr.mxu0 0.0
        %774 = vmatpush1.msra.mxu0 0.0
        %775 = vmatprep.subr.mxu0 0.0
        %776 = vmatpush1.msra.mxu0 0.0
        %777 = vmatprep.subr.mxu0 0.0
        %778 = vmatpush1.msra.mxu0 0.0
        %779 = vmatprep.subr.mxu0 0.0
        %780 = vmatpush1.msra.mxu0 0.0
        %781 = vmatprep.subr.mxu0 0.0
        %782 = vmatpush1.msra.mxu0 0.0
        %783 = vmatprep.subr.mxu0 0.0
        %784 = vmatpush1.msra.mxu0 0.0
        %785 = vmatprep.subr.mxu0 0.0
        %786 = vmatpush1.msra.mxu0 0.0
        %787 = vmatprep.subr.mxu0 0.0
        %788 = vmatpush1.msra.mxu0 0.0
        %789 = vmatprep.subr.mxu0 0.0
        %790 = vmatpush1.msra.mxu0 0.0
        %791 = vmatprep.subr.mxu0 0.0
        %792 = vmatpush1.msra.mxu0 0.0
        %793 = vmatprep.subr.mxu0 0.0
        %794 = vmatpush1.msra.mxu0 0.0
        %795 = vmatprep.subr.mxu0 0.0
        %796 = vmatpush1.msra.mxu0 0.0
        %797 = vmatprep.subr.mxu0 0.0
        %798 = vmatpush1.msra.mxu0 0.0
        %799 = vmatprep.subr.mxu0 0.0
        %800 = vmatpush1.msra.mxu0 0.0
        %801 = vmatprep.subr.mxu0 0.0
        %802 = vmatpush1.msra.mxu0 0.0
        %803 = vmatprep.subr.mxu0 0.0
        %804 = vmatpush1.msra.mxu0 0.0
        %805 = vmatprep.subr.mxu0 0.0
        %806 = vmatpush1.msra.mxu0 0.0
        %807 = vmatprep.subr.mxu0 0.0
        %808 = vmatpush1.msra.mxu0 0.0
        %809 = vmatprep.subr.mxu0 0.0
        %810 = vmatpush1.msra.mxu0 0.0
        %811 = vmatprep.subr.mxu0 0.0
        %812 = vmatpush1.msra.mxu0 0.0
        %813 = vmatprep.subr.mxu0 0.0
        %814 = vmatpush1.msra.mxu0 0.0
        %815 = vmatprep.subr.mxu0 0.0
        %816 = vmatpush1.msra.mxu0 0.0
        %817 = vmatprep.subr.mxu0 0.0
        %818 = vmatpush1.msra.mxu0 0.0
        %819 = vmatprep.subr.mxu0 0.0
        %820 = vmatpush1.msra.mxu0 0.0
        %821 = vmatprep.subr.mxu0 0.0
        %822 = vmatpush1.msra.mxu0 0.0
        %823 = vmatprep.subr.mxu0 0.0
        %824 = vmatpush1.msra.mxu0 0.0
        %825 = vmatprep.subr.mxu0 0.0
        %826 = vmatpush1.msra.mxu0 0.0
        %827 = vmatprep.mubr.f32.mxu0 0.0
        %828 = vmatmul.mubr.f32.gmra.mrb[0].mxu0 %v424
        %v829 = vpop.f32.mrb[0].mxu0
        %v830 = vadd.f32 0.0, %v829
        %v831 = vpop.f32.mrb[0].mxu0
        %832 = vmatprep.mubr.f32.mxu0 0.0
        %833 = vmatmul.mubr.f32.gmra.mrb[0].mxu0 %v427
        %v834 = vpop.f32.mrb[0].mxu0
        %v835 = vadd.f32 0.0, %v834
        %v836 = vpop.f32.mrb[0].mxu0
        %837 = vdwg.mxu0
        %838 = vmatprep.subr.mxu0 0.0
        %839 = vmatpush1.msra.mxu0 %v611
        %840 = vmatprep.subr.mxu0 0.0
        %841 = vmatpush1.msra.mxu0 %v612
        %842 = vmatprep.subr.mxu0 0.0
        %843 = vmatpush1.msra.mxu0 0.0
        %844 = vmatprep.subr.mxu0 0.0
        %845 = vmatpush1.msra.mxu0 0.0
        %846 = vmatprep.subr.mxu0 0.0
        %847 = vmatpush1.msra.mxu0 0.0
        %848 = vmatprep.subr.mxu0 0.0
        %849 = vmatpush1.msra.mxu0 0.0
        %850 = vmatprep.subr.mxu0 0.0
        %851 = vmatpush1.msra.mxu0 0.0
        %852 = vmatprep.subr.mxu0 0.0
        %853 = vmatpush1.msra.mxu0 0.0
        %854 = vmatprep.subr.mxu0 0.0
        %855 = vmatpush1.msra.mxu0 0.0
        %856 = vmatprep.subr.mxu0 0.0
        %857 = vmatpush1.msra.mxu0 0.0
        %858 = vmatprep.subr.mxu0 0.0
        %859 = vmatpush1.msra.mxu0 0.0
        %860 = vmatprep.subr.mxu0 0.0
        %861 = vmatpush1.msra.mxu0 0.0
        %862 = vmatprep.subr.mxu0 0.0
        %863 = vmatpush1.msra.mxu0 0.0
        %864 = vmatprep.subr.mxu0 0.0
        %865 = vmatpush1.msra.mxu0 0.0
        %866 = vmatprep.subr.mxu0 0.0
        %867 = vmatpush1.msra.mxu0 0.0
        %868 = vmatprep.subr.mxu0 0.0
        %869 = vmatpush1.msra.mxu0 0.0
        %870 = vmatprep.subr.mxu0 0.0
        %871 = vmatpush1.msra.mxu0 0.0
        %872 = vmatprep.subr.mxu0 0.0
        %873 = vmatpush1.msra.mxu0 0.0
        %874 = vmatprep.subr.mxu0 0.0
        %875 = vmatpush1.msra.mxu0 0.0
        %876 = vmatprep.subr.mxu0 0.0
        %877 = vmatpush1.msra.mxu0 0.0
        %878 = vmatprep.subr.mxu0 0.0
        %879 = vmatpush1.msra.mxu0 0.0
        %880 = vmatprep.subr.mxu0 0.0
        %881 = vmatpush1.msra.mxu0 0.0
        %882 = vmatprep.subr.mxu0 0.0
        %883 = vmatpush1.msra.mxu0 0.0
        %884 = vmatprep.subr.mxu0 0.0
        %885 = vmatpush1.msra.mxu0 0.0
        %886 = vmatprep.subr.mxu0 0.0
        %887 = vmatpush1.msra.mxu0 0.0
        %888 = vmatprep.subr.mxu0 0.0
        %889 = vmatpush1.msra.mxu0 0.0
        %890 = vmatprep.subr.mxu0 0.0
        %891 = vmatpush1.msra.mxu0 0.0
        %892 = vmatprep.subr.mxu0 0.0
        %893 = vmatpush1.msra.mxu0 0.0
        %894 = vmatprep.subr.mxu0 0.0
        %895 = vmatpush1.msra.mxu0 0.0
        %896 = vmatprep.subr.mxu0 0.0
        %897 = vmatpush1.msra.mxu0 0.0
        %898 = vmatprep.subr.mxu0 0.0
        %899 = vmatpush1.msra.mxu0 0.0
        %900 = vmatprep.subr.mxu0 0.0
        %901 = vmatpush1.msra.mxu0 0.0
        %902 = vmatprep.mubr.f32.mxu0 0.0
        %903 = vmatmul.mubr.f32.gmra.mrb[0].mxu0 %v505
        %v904 = vpop.f32.mrb[0].mxu0
        %v905 = vadd.f32 0.0, %v904
        %v906 = vpop.f32.mrb[0].mxu0
        %907 = vmatprep.mubr.f32.mxu0 0.0
        %908 = vmatmul.mubr.f32.gmra.mrb[0].mxu0 %v508
        %v909 = vpop.f32.mrb[0].mxu0
        %v910 = vadd.f32 0.0, %v909
        %v911 = vpop.f32.mrb[0].mxu0
        %912 = vdwg.mxu0
        %v913 = vsel %vm585, %v680, 0.0
        %v914 = vsel %vm585, %v755, 0.0
        %v915 = vadd.f32 %v913, %v914
        %v916 = vsel %vm585, %v830, 0.0
        %v917 = vadd.f32 %v915, %v916
        %v918 = vsel %vm585, %v905, 0.0
        %v919 = vadd.f32 %v917, %v918
        %v920 = vsel %vm585, %v685, 0.0
        %v921 = vsel %vm585, %v760, 0.0
        %v922 = vadd.f32 %v920, %v921
        %v923 = vsel %vm585, %v835, 0.0
        %v924 = vadd.f32 %v922, %v923
        %v925 = vsel %vm585, %v910, 0.0
        %v926 = vadd.f32 %v924, %v925
        %v927 = vadd.s32 %v600, 1
        %vm928 = vcmp.eq.s32.totalorder %v251, %v927
        %v929 = vsel %vm928, 1, 0
        %v930 = vcvt.s32.f32 %v929
        %v932 = vsel %vm260, %v930, 0
        %934 = vmatprep.subr.mxu0 0.0
        %935 = vmatpush1.msra.mxu0 %v919
        %936 = vmatprep.subr.mxu0 0.0
        %937 = vmatpush1.msra.mxu0 %v926
        %938 = vmatprep.subr.mxu0 0.0
        %939 = vmatpush1.msra.mxu0 0.0
        %940 = vmatprep.subr.mxu0 0.0
        %941 = vmatpush1.msra.mxu0 0.0
        %942 = vmatprep.subr.mxu0 0.0
        %943 = vmatpush1.msra.mxu0 0.0
        %944 = vmatprep.subr.mxu0 0.0
        %945 = vmatpush1.msra.mxu0 0.0
        %946 = vmatprep.subr.mxu0 0.0
        %947 = vmatpush1.msra.mxu0 0.0
        %948 = vmatprep.subr.mxu0 0.0
        %949 = vmatpush1.msra.mxu0 0.0
        %950 = vmatprep.subr.mxu0 0.0
        %951 = vmatpush1.msra.mxu0 0.0
        %952 = vmatprep.subr.mxu0 0.0
        %953 = vmatpush1.msra.mxu0 0.0
        %954 = vmatprep.subr.mxu0 0.0
        %955 = vmatpush1.msra.mxu0 0.0
        %956 = vmatprep.subr.mxu0 0.0
        %957 = vmatpush1.msra.mxu0 0.0
        %958 = vmatprep.subr.mxu0 0.0
        %959 = vmatpush1.msra.mxu0 0.0
        %960 = vmatprep.subr.mxu0 0.0
        %961 = vmatpush1.msra.mxu0 0.0
        %962 = vmatprep.subr.mxu0 0.0
        %963 = vmatpush1.msra.mxu0 0.0
        %964 = vmatprep.subr.mxu0 0.0
        %965 = vmatpush1.msra.mxu0 0.0
        %966 = vmatprep.subr.mxu0 0.0
        %967 = vmatpush1.msra.mxu0 0.0
        %968 = vmatprep.subr.mxu0 0.0
        %969 = vmatpush1.msra.mxu0 0.0
        %970 = vmatprep.subr.mxu0 0.0
        %971 = vmatpush1.msra.mxu0 0.0
        %972 = vmatprep.subr.mxu0 0.0
        %973 = vmatpush1.msra.mxu0 0.0
        %974 = vmatprep.subr.mxu0 0.0
        %975 = vmatpush1.msra.mxu0 0.0
        %976 = vmatprep.subr.mxu0 0.0
        %977 = vmatpush1.msra.mxu0 0.0
        %978 = vmatprep.subr.mxu0 0.0
        %979 = vmatpush1.msra.mxu0 0.0
        %980 = vmatprep.subr.mxu0 0.0
        %981 = vmatpush1.msra.mxu0 0.0
        %982 = vmatprep.subr.mxu0 0.0
        %983 = vmatpush1.msra.mxu0 0.0
        %984 = vmatprep.subr.mxu0 0.0
        %985 = vmatpush1.msra.mxu0 0.0
        %986 = vmatprep.subr.mxu0 0.0
        %987 = vmatpush1.msra.mxu0 0.0
        %988 = vmatprep.subr.mxu0 0.0
        %989 = vmatpush1.msra.mxu0 0.0
        %990 = vmatprep.subr.mxu0 0.0
        %991 = vmatpush1.msra.mxu0 0.0
        %992 = vmatprep.subr.mxu0 0.0
        %993 = vmatpush1.msra.mxu0 0.0
        %994 = vmatprep.subr.mxu0 0.0
        %995 = vmatpush1.msra.mxu0 0.0
        %996 = vmatprep.subr.mxu0 0.0
        %997 = vmatpush1.msra.mxu0 0.0
        %998 = vmatprep.mubr.f32.mxu0 0.0
        %999 = vmatmul.mubr.f32.gmra.mrb[0].mxu0 %v932
        %v1000 = vpop.f32.mrb[0].mxu0
        %v1001 = vadd.f32 0.0, %v1000
        %v1002 = vpop.f32.mrb[0].mxu0
        %1003 = vdwg.mxu0
        %v1005 = vsel %vm260, %v603, 0
        %1007 = vmatprep.subr.mxu0 0.0
        %1008 = vmatpush1.msra.mxu0 %v592
        %1009 = vmatprep.subr.mxu0 0.0
        %1010 = vmatpush1.msra.mxu0 %v599
        %1011 = vmatprep.subr.mxu0 0.0
        %1012 = vmatpush1.msra.mxu0 0.0
        %1013 = vmatprep.subr.mxu0 0.0
        %1014 = vmatpush1.msra.mxu0 0.0
        %1015 = vmatprep.subr.mxu0 0.0
        %1016 = vmatpush1.msra.mxu0 0.0
        %1017 = vmatprep.subr.mxu0 0.0
        %1018 = vmatpush1.msra.mxu0 0.0
        %1019 = vmatprep.subr.mxu0 0.0
        %1020 = vmatpush1.msra.mxu0 0.0
        %1021 = vmatprep.subr.mxu0 0.0
        %1022 = vmatpush1.msra.mxu0 0.0
        %1023 = vmatprep.subr.mxu0 0.0
        %1024 = vmatpush1.msra.mxu0 0.0
        %1025 = vmatprep.subr.mxu0 0.0
        %1026 = vmatpush1.msra.mxu0 0.0
        %1027 = vmatprep.subr.mxu0 0.0
        %1028 = vmatpush1.msra.mxu0 0.0
        %1029 = vmatprep.subr.mxu0 0.0
        %1030 = vmatpush1.msra.mxu0 0.0
        %1031 = vmatprep.subr.mxu0 0.0
        %1032 = vmatpush1.msra.mxu0 0.0
        %1033 = vmatprep.subr.mxu0 0.0
        %1034 = vmatpush1.msra.mxu0 0.0
        %1035 = vmatprep.subr.mxu0 0.0
        %1036 = vmatpush1.msra.mxu0 0.0
        %1037 = vmatprep.subr.mxu0 0.0
        %1038 = vmatpush1.msra.mxu0 0.0
        %1039 = vmatprep.subr.mxu0 0.0
        %1040 = vmatpush1.msra.mxu0 0.0
        %1041 = vmatprep.subr.mxu0 0.0
        %1042 = vmatpush1.msra.mxu0 0.0
        %1043 = vmatprep.subr.mxu0 0.0
        %1044 = vmatpush1.msra.mxu0 0.0
        %1045 = vmatprep.subr.mxu0 0.0
        %1046 = vmatpush1.msra.mxu0 0.0
        %1047 = vmatprep.subr.mxu0 0.0
        %1048 = vmatpush1.msra.mxu0 0.0
        %1049 = vmatprep.subr.mxu0 0.0
        %1050 = vmatpush1.msra.mxu0 0.0
        %1051 = vmatprep.subr.mxu0 0.0
        %1052 = vmatpush1.msra.mxu0 0.0
        %1053 = vmatprep.subr.mxu0 0.0
        %1054 = vmatpush1.msra.mxu0 0.0
        %1055 = vmatprep.subr.mxu0 0.0
        %1056 = vmatpush1.msra.mxu0 0.0
        %1057 = vmatprep.subr.mxu0 0.0
        %1058 = vmatpush1.msra.mxu0 0.0
        %1059 = vmatprep.subr.mxu0 0.0
        %1060 = vmatpush1.msra.mxu0 0.0
        %1061 = vmatprep.subr.mxu0 0.0
        %1062 = vmatpush1.msra.mxu0 0.0
        %1063 = vmatprep.subr.mxu0 0.0
        %1064 = vmatpush1.msra.mxu0 0.0
        %1065 = vmatprep.subr.mxu0 0.0
        %1066 = vmatpush1.msra.mxu0 0.0
        %1067 = vmatprep.subr.mxu0 0.0
        %1068 = vmatpush1.msra.mxu0 0.0
        %1069 = vmatprep.subr.mxu0 0.0
        %1070 = vmatpush1.msra.mxu0 0.0
        %1071 = vmatprep.mubr.f32.mxu0 0.0
        %1072 = vmatmul.mubr.f32.gmra.mrb[0].mxu0 %v1005
        %v1073 = vpop.f32.mrb[0].mxu0
        %v1074 = vadd.f32 %v1001, %v1073
        %v1075 = vpop.f32.mrb[0].mxu0
        %1076 = vdwg.mxu0
        %v1077 = vld [vmem:[%s3] sm:$0x1]
        %v1079 = vlaneseq
        %v1080 = vshrl.u32 %v1079, 7
        %v1081 = vsub.s32 0, %v1080
        %v1082 = vrot.slane %v1077, %v1081
        %v1084 = vadd.f32 %v1074, %v1082
        %v1085 = vmax.f32 %v1084, 0.0
        %vm1086 = vcmask 64512
        %1087 = vst.msk [vmem:[%s205] sm:$0xff] %vm1086, %v1085
        %1089 = vrot.lane.b32.xlu0 %v1085, 120
        %v1090 = vpop.permute.xlu0 %1089
        %s1092 = scalar_lea.vmem %s205, 8 [#allocation2]
        %1093 = vst.msk [vmem:[%s1092] sm:$0xff] %vm1086, %v1090
        %1094 = vrot.lane.b32.xlu0 %v1085, 112
        %v1095 = vpop.permute.xlu0 %1094
        %s1097 = scalar_lea.vmem %s205, 16 [#allocation2]
        %1098 = vst.msk [vmem:[%s1097] sm:$0xff] %vm1086, %v1095
        %1099 = vrot.lane.b32.xlu0 %v1085, 104
        %v1100 = vpop.permute.xlu0 %1099
        %s1102 = scalar_lea.vmem %s205, 24 [#allocation2]
        %1103 = vst.msk [vmem:[%s1102] sm:$0xff] %vm1086, %v1100
        %1104 = vrot.lane.b32.xlu0 %v1085, 96
        %v1105 = vpop.permute.xlu0 %1104
        %s1107 = scalar_lea.vmem %s205, 32 [#allocation2]
        %1108 = vst.msk [vmem:[%s1107] sm:$0xff] %vm1086, %v1105
        %1109 = vrot.lane.b32.xlu0 %v1085, 88
        %v1110 = vpop.permute.xlu0 %1109
        %s1112 = scalar_lea.vmem %s205, 40 [#allocation2]
        %1113 = vst.msk [vmem:[%s1112] sm:$0xff] %vm1086, %v1110
        %1114 = vrot.lane.b32.xlu0 %v1085, 80
        %v1115 = vpop.permute.xlu0 %1114
        %s1117 = scalar_lea.vmem %s205, 48 [#allocation2]
        %1118 = vst.msk [vmem:[%s1117] sm:$0xff] %vm1086, %v1115
        %1119 = vrot.lane.b32.xlu0 %v1085, 72
        %v1120 = vpop.permute.xlu0 %1119
        %s1122 = scalar_lea.vmem %s205, 56 [#allocation2]
        %1123 = vst.msk [vmem:[%s1122] sm:$0xff] %vm1086, %v1120
        %s1124 = sand.u32 %s120, 1
        %s1125 = scalar_lea.sflag [#allocation3], %s1124
        %s1126 = sand.u32 %s120, 1
        %s1127 = smul.addr %s1126, 64
        %s1128 = scalar_lea.vmem [#allocation2], %s1127
        // Predicated region
        $region37: #{_lambda_.1} parent=35 // pred_check
          %p1129 = pneg %p130
        $region38: #{_lambda_.1} parent=35 // pred_check_branch
          %1131 = sbr.rel (%p1129) target = $region40
        $region39: #{_lambda_.1} parent=35 // pred_region
          %s1133 = ssub.s32 1024, 1024
          %1134 = vsyncadd %s1125, %s1133
          %s1135 = smul.addr %s18, 8
          %s1136 = smul.addr %s1135, 128
          %s1137 = scalar_lea.hbm %s4, %s1136
          %s1138 = sshll.u32 %s1128, 4
          %s1139 = int_to_ptr.vmem [resolvable:$true] %s1138
          %1144 = dma.vmem_to_hbm [thread:$0]  %s1139, 1024, %s1137, %s1125, 128, 128, 8
        $region40: #{_lambda_.1} parent=35 // pred_fallthru
          _
      $region36: #{_lambda_.1} parent=5 // pred_fallthru
        _
      %p1145 = scmp.le.s32.totalorder 2, %s13
      // Predicated region
      $region41: #{_lambda_.1} parent=5 // pred_check
        %p1146 = pneg %p1145
      $region42: #{_lambda_.1} parent=5 // pred_check_branch
        %1148 = sbr.rel (%p1146) target = $region44
      $region43: #{_lambda_.1} parent=5 // pred_region
        %s1149 = ssub.s32 %s13, 2
        // Predicated region
        $region45: #{_lambda_.1} parent=43 // pred_check
          %p1150 = pneg %p136
        $region46: #{_lambda_.1} parent=43 // pred_check_branch
          %1152 = sbr.rel (%p1150) target = $region48
        $region47: #{_lambda_.1} parent=43 // pred_region
          %s1153 = sand.u32 %s121, 1
          %s1154 = scalar_lea.sflag [#allocation3], %s1153
          %s1155 = sand.u32 %s121, 1
          %s1156 = smul.addr %s1155, 64
          %s1157 = scalar_lea.vmem [#allocation2], %s1156
          %1158 = dma.done %s1154, 1024
        $region48: #{_lambda_.1} parent=43 // pred_fallthru
          _
      $region44: #{_lambda_.1} parent=5 // pred_fallthru
        _
    $region6: #{_lambda_.1} parent=1 // loop_footer
      %s17 = sadd.s32 1, %s13
    $region7: #{_lambda_.1} parent=1 // loop_footer_branch
      %12 = sbr.rel target = $region3
    $region8: #{_lambda_.1} parent=1 // loop_exit
      _
    %1159 = vsyncpa [#allocation3], 1
    %s1160 = scalar_lea.sflag [#allocation3], 1
    %1161 = vsyncpa %s1160, 1

</llo_original>
